<compile_context>
chip_gen: v7x
topology: tpu7x:2x2x1
jax: 0.10.0
libtpu: 0.0.40
codegen_flags: <defaults>
</compile_context>

<pallas_src>
import functools

import jax
import jax.numpy as jnp
from jax import lax
from jax.experimental import pallas as pl
from jax.experimental.pallas import tpu as pltpu

INPUT_SIZE = 4
HIDDEN_SIZE = 20
OUTPUT_SIZE = 3

_LANES = 128
_TB_MAX = 32768   # live VMEM ~ 350 B/column -> ~11 MiB at 32768: fits every
                  # generation's *default* scoped-VMEM limit (v5e 16 MiB is tightest).


def _round_up(x: int, m: int) -> int:
    return ((x + m - 1) // m) * m


def _cdiv(a: int, b: int) -> int:
    return -(-a // b)


def _choose_tb(padded_batch: int) -> int:
    """Batch-tile width (multiple of 128): as large as the VMEM budget allows,
    preferring >=2 equal tiles (keeps both v7x TensorCores busy via the "parallel"
    grid axis; harmless on single-core v5e/v6e) that divide the batch exactly so
    no extra padding copy is needed."""
    bp = padded_batch
    if bp <= 1024:                       # tiny problem: one tile, overhead-bound anyway
        return bp
    q = bp // _LANES                     # batch in units of 128 lanes
    min_tiles = max(2, _cdiv(bp, _TB_MAX))
    for nt in range(min_tiles, min(q, min_tiles + 16) + 1):
        if q % nt == 0:                  # exact split -> zero extra padding
            return (q // nt) * _LANES
    return _TB_MAX                       # rare fallback; wrapper pads to a multiple


def _ann_one_hid_kernel(xT_ref, w1_ref, b1_ref, w2_ref, b2_ref, o_ref):
    # xT_ref: [4, TB]   batch tile on the 128-wide lane axis (lane-dense loads)
    # w1_ref: [20, 4]   torch layout, used directly (no in-kernel transposes)
    # b1_ref: [20, 1]
    # w2_ref: [3, 20]
    # b2_ref: [3, 1]
    # o_ref : [3, TB]   lane-dense output tile -> unmasked vector stores
    xT = xT_ref[...]
    w1 = w1_ref[...]

    # Layer 1 (K=4) on the VPU as exact-f32 broadcast FMAs (outer products
    # [20,1] x [1,TB]); K=4 would waste >99% of an MXU pass.
    h = b1_ref[...] + w1[:, 0:1] * xT[0:1, :]
    h = h + w1[:, 1:2] * xT[1:2, :]
    h = h + w1[:, 2:3] * xT[2:3, :]
    h = h + w1[:, 3:4] * xT[3:4, :]
    h = jnp.maximum(h, 0.0)                                            # [20, TB]

    # Layer 2 (K=20) on the MXU; torch-layout [3, 20] is already the correct LHS
    # for the batch-on-lanes compute.
    y = jnp.dot(w2_ref[...], h, preferred_element_type=jnp.float32)    # [3, TB]
    o_ref[...] = (y + b2_ref[...]).astype(o_ref.dtype)


@functools.partial(jax.jit, static_argnames=("tb",))
def ann_one_hid_feature_major(xT, w1, b1, w2, b2, *, tb=None):
    """Fused forward on feature-major activations (zero relayouts).

    xT: [4, B] float32.  Returns [3, B] float32 = w2 @ relu(w1 @ xT + b1) + b2.
    """
    assert xT.shape[0] == INPUT_SIZE, xT.shape
    B = xT.shape[1]

    Bp = _round_up(max(B, 1), _LANES)
    if tb is None:
        tb = _choose_tb(Bp)
    if tb % _LANES != 0:
        raise ValueError(f"tb={tb} must be a multiple of {_LANES}")
    num_tiles = _cdiv(Bp, tb)
    Bp = num_tiles * tb

    if Bp != B:
        xT = jnp.pad(xT, ((0, 0), (0, Bp - B)))          # fusable into the input DMA
    b1c = b1.reshape(HIDDEN_SIZE, 1)
    b2c = b2.reshape(OUTPUT_SIZE, 1)

    itemsize = jnp.dtype(jnp.float32).itemsize
    cost = pl.CostEstimate(
        flops=2 * Bp * (INPUT_SIZE * HIDDEN_SIZE + HIDDEN_SIZE * OUTPUT_SIZE),
        transcendentals=0,
        bytes_accessed=(Bp * (INPUT_SIZE + OUTPUT_SIZE)
                        + HIDDEN_SIZE * (INPUT_SIZE + 1)
                        + OUTPUT_SIZE * (HIDDEN_SIZE + 1)) * itemsize,
    )

    # Live VMEM ~ 350 B/column (double-buffered x & out tiles + f32 temporaries).
    # Default tiles stay under every generation's default scoped-VMEM limit; only
    # raise the limit when a caller explicitly asks for a larger tile.
    est_vmem = 352 * tb + (1 << 16)
    compiler_kwargs = {}
    if est_vmem > (14 << 20):
        compiler_kwargs["vmem_limit_bytes"] = int(est_vmem * 3 // 2)

    yT = pl.pallas_call(
        _ann_one_hid_kernel,
        out_shape=jax.ShapeDtypeStruct((OUTPUT_SIZE, Bp), jnp.float32),
        grid_spec=pltpu.PrefetchScalarGridSpec(
            num_scalar_prefetch=0,
            grid=(num_tiles,),
            in_specs=[
                # Streamed activations: one batch tile per grid step, lanes = batch.
                pl.BlockSpec((INPUT_SIZE, tb), lambda i: (0, i)),
                # Weights / biases: constant block index -> resident in VMEM.
                pl.BlockSpec((HIDDEN_SIZE, INPUT_SIZE), lambda i: (0, 0)),
                pl.BlockSpec((HIDDEN_SIZE, 1), lambda i: (0, 0)),
                pl.BlockSpec((OUTPUT_SIZE, HIDDEN_SIZE), lambda i: (0, 0)),
                pl.BlockSpec((OUTPUT_SIZE, 1), lambda i: (0, 0)),
            ],
            out_specs=pl.BlockSpec((OUTPUT_SIZE, tb), lambda i: (0, i)),
        ),
        compiler_params=pltpu.CompilerParams(
            # Independent batch tiles -> megacore sharding on v7x.
            dimension_semantics=("parallel",),
            # Let XLA fuse the x-producer (transpose/pad) into the kernel's input
            # stream instead of materializing it in HBM.
            allow_input_fusion=[True, False, False, False, False],
            **compiler_kwargs,
        ),
        cost_estimate=cost,
    )(xT, w1, b1c, w2, b2c)

    return yT[:, :B] if Bp != B else yT


@functools.partial(jax.jit, static_argnames=("min_pallas_batch", "tb"))
def ann_one_hid(x, w1, b1, w2, b2, *, min_pallas_batch=4096, tb=None):
    """Batch-major (PyTorch nn.Module contract): x [B, 4] -> [B, 3].

    Small/medium batches use the fused XLA path (custom-call launch + layout flips
    dominate there).  Large batches stream through the Pallas kernel; the x.T
    producer may fuse into the kernel input DMA (allow_input_fusion) and the final
    .T is left for XLA to fuse into downstream consumers inside the same jit.
    """
    if x.shape[0] < min_pallas_batch:
        return jnp.maximum(x @ w1.T + b1, 0.0) @ w2.T + b2
    return ann_one_hid_feature_major(x.T, w1, b1, w2, b2, tb=tb).T


def ann_one_hid_reference(x, w1, b1, w2, b2):
    """Near-exact f32 reference (matches the PyTorch module's forward)."""
    hp = lax.Precision.HIGHEST
    h = jnp.maximum(jnp.dot(x, w1.T, precision=hp) + b1, 0.0)
    return jnp.dot(h, w2.T, precision=hp) + b2


def init_params(key):
    """Deterministic init mimicking nn.Linear's uniform(-1/sqrt(fan_in), ...)."""
    k1, k2, k3, k4 = jax.random.split(key, 4)
    bound1 = 1.0 / jnp.sqrt(INPUT_SIZE)
    bound2 = 1.0 / jnp.sqrt(HIDDEN_SIZE)
    w1 = jax.random.uniform(k1, (HIDDEN_SIZE, INPUT_SIZE), jnp.float32, -bound1, bound1)
    b1 = jax.random.uniform(k2, (HIDDEN_SIZE,), jnp.float32, -bound1, bound1)
    w2 = jax.random.uniform(k3, (OUTPUT_SIZE, HIDDEN_SIZE), jnp.float32, -bound2, bound2)
    b2 = jax.random.uniform(k4, (OUTPUT_SIZE,), jnp.float32, -bound2, bound2)
    return w1, b1, w2, b2


if __name__ == "__main__":
    key = jax.random.PRNGKey(0)
    kx1, kx2, kp = jax.random.split(key, 3)
    w1, b1, w2, b2 = init_params(kp)

    # Tolerance covers MXU reduced-precision f32 passes on the K=20 layer across
    # generations (layer 1 is exact f32 on the VPU); structural bugs are O(1) off.
    tol = dict(atol=2e-2, rtol=2e-2)

    # 1) Feature-major core (the zero-relayout contract), multi-tile parallel grid.
    B1 = 2560
    x1 = jax.random.normal(kx1, (B1, INPUT_SIZE), jnp.float32)
    y1 = jax.block_until_ready(ann_one_hid_feature_major(x1.T, w1, b1, w2, b2))
    assert y1.shape == (OUTPUT_SIZE, B1)
    assert jnp.allclose(y1.T, ann_one_hid_reference(x1, w1, b1, w2, b2), **tol)

    # 2) Batch-major (PyTorch-contract) wrapper through the Pallas path, with a
    #    ragged batch exercising lane padding + a 2-step "parallel" grid.
    B2 = 4500
    x2 = jax.random.normal(kx2, (B2, INPUT_SIZE), jnp.float32)
    y2 = jax.block_until_ready(ann_one_hid(x2, w1, b1, w2, b2, min_pallas_batch=1))
    assert y2.shape == (B2, OUTPUT_SIZE)
    assert jnp.allclose(y2, ann_one_hid_reference(x2, w1, b1, w2, b2), **tol)

    # 3) Small batch routes to the fused XLA fallback via the raised threshold.
    B3 = 37
    x3 = jax.random.normal(kx1, (B3, INPUT_SIZE), jnp.float32)
    y3 = jax.block_until_ready(ann_one_hid(x3, w1, b1, w2, b2))
    assert y3.shape == (B3, OUTPUT_SIZE)
    assert jnp.allclose(y3, ann_one_hid_reference(x3, w1, b1, w2, b2), **tol)

    print("KERNEL_OK")
</pallas_src>

<mosaic_0001>
module attributes {stable_mosaic.version = 11 : i64} {
  func.func @_ann_one_hid_kernel(%arg0: i32, %arg1: memref<4x1280xf32, #tpu.memory_space<vmem>>, %arg2: memref<20x4xf32, #tpu.memory_space<vmem>>, %arg3: memref<20x1xf32, #tpu.memory_space<vmem>>, %arg4: memref<3x20xf32, #tpu.memory_space<vmem>>, %arg5: memref<3x1xf32, #tpu.memory_space<vmem>>, %arg6: memref<3x1280xf32, #tpu.memory_space<vmem>>) attributes {dimension_semantics = [#tpu.dimension_semantics<parallel>], iteration_bounds = array<i64: 2>, scalar_prefetch = 0 : i64, scratch_operands = 0 : i64, tpu.core_type = #tpu.core_type<tc>, window_params = [{transform_indices = @transform_0, window_bounds = array<i64: 4, 1280>}, {pipeline_mode = #tpu.pipeline_mode<synchronous>, transform_indices = @transform_1, window_bounds = array<i64: 20, 4>}, {pipeline_mode = #tpu.pipeline_mode<synchronous>, transform_indices = @transform_2, window_bounds = array<i64: 20, 1>}, {pipeline_mode = #tpu.pipeline_mode<synchronous>, transform_indices = @transform_3, window_bounds = array<i64: 3, 20>}, {pipeline_mode = #tpu.pipeline_mode<synchronous>, transform_indices = @transform_4, window_bounds = array<i64: 3, 1>}, {transform_indices = @transform_5, window_bounds = array<i64: 3, 1280>}]} {
    %c0 = arith.constant 0 : index
    %c0_0 = arith.constant 0 : index
    %0 = vector.load %arg1[%c0, %c0_0] : memref<4x1280xf32, #tpu.memory_space<vmem>>, vector<4x1280xf32>
    %c0_1 = arith.constant 0 : index
    %c0_2 = arith.constant 0 : index
    %1 = vector.load %arg2[%c0_1, %c0_2] : memref<20x4xf32, #tpu.memory_space<vmem>>, vector<20x4xf32>
    %c0_3 = arith.constant 0 : index
    %c0_4 = arith.constant 0 : index
    %2 = vector.load %arg3[%c0_3, %c0_4] : memref<20x1xf32, #tpu.memory_space<vmem>>, vector<20x1xf32>
    %3 = vector.extract_strided_slice %1 {offsets = [0, 0], sizes = [20, 1], strides = [1, 1]} : vector<20x4xf32> to vector<20x1xf32>
    %4 = vector.extract_strided_slice %0 {offsets = [0, 0], sizes = [1, 1280], strides = [1, 1]} : vector<4x1280xf32> to vector<1x1280xf32>
    %5 = vector.broadcast %3 : vector<20x1xf32> to vector<20x1280xf32>
    %6 = vector.broadcast %4 : vector<1x1280xf32> to vector<20x1280xf32>
    %7 = arith.mulf %5, %6 : vector<20x1280xf32>
    %8 = vector.broadcast %2 : vector<20x1xf32> to vector<20x1280xf32>
    %9 = arith.addf %8, %7 : vector<20x1280xf32>
    %10 = vector.extract_strided_slice %1 {offsets = [0, 1], sizes = [20, 1], strides = [1, 1]} : vector<20x4xf32> to vector<20x1xf32>
    %11 = vector.extract_strided_slice %0 {offsets = [1, 0], sizes = [1, 1280], strides = [1, 1]} : vector<4x1280xf32> to vector<1x1280xf32>
    %12 = vector.broadcast %10 : vector<20x1xf32> to vector<20x1280xf32>
    %13 = vector.broadcast %11 : vector<1x1280xf32> to vector<20x1280xf32>
    %14 = arith.mulf %12, %13 : vector<20x1280xf32>
    %15 = arith.addf %9, %14 : vector<20x1280xf32>
    %16 = vector.extract_strided_slice %1 {offsets = [0, 2], sizes = [20, 1], strides = [1, 1]} : vector<20x4xf32> to vector<20x1xf32>
    %17 = vector.extract_strided_slice %0 {offsets = [2, 0], sizes = [1, 1280], strides = [1, 1]} : vector<4x1280xf32> to vector<1x1280xf32>
    %18 = vector.broadcast %16 : vector<20x1xf32> to vector<20x1280xf32>
    %19 = vector.broadcast %17 : vector<1x1280xf32> to vector<20x1280xf32>
    %20 = arith.mulf %18, %19 : vector<20x1280xf32>
    %21 = arith.addf %15, %20 : vector<20x1280xf32>
    %22 = vector.extract_strided_slice %1 {offsets = [0, 3], sizes = [20, 1], strides = [1, 1]} : vector<20x4xf32> to vector<20x1xf32>
    %23 = vector.extract_strided_slice %0 {offsets = [3, 0], sizes = [1, 1280], strides = [1, 1]} : vector<4x1280xf32> to vector<1x1280xf32>
    %24 = vector.broadcast %22 : vector<20x1xf32> to vector<20x1280xf32>
    %25 = vector.broadcast %23 : vector<1x1280xf32> to vector<20x1280xf32>
    %26 = arith.mulf %24, %25 : vector<20x1280xf32>
    %27 = arith.addf %21, %26 : vector<20x1280xf32>
    %cst = arith.constant 0.000000e+00 : f32
    %28 = vector.broadcast %cst : f32 to vector<20x1280xf32>
    %29 = arith.maximumf %27, %28 : vector<20x1280xf32>
    %c0_5 = arith.constant 0 : index
    %c0_6 = arith.constant 0 : index
    %30 = vector.load %arg4[%c0_5, %c0_6] : memref<3x20xf32, #tpu.memory_space<vmem>>, vector<3x20xf32>
    %cst_7 = arith.constant dense<0.000000e+00> : vector<3x1280xf32>
    %31 = tpu.matmul %30, %29, %cst_7 {dimension_numbers = #tpu.dot_dimension_numbers<[1], [0], [0], [1], [0, 0, 1, 1], [], []>} : vector<3x20xf32>, vector<20x1280xf32>, vector<3x1280xf32> -> vector<3x1280xf32>
    %c0_8 = arith.constant 0 : index
    %c0_9 = arith.constant 0 : index
    %32 = vector.load %arg5[%c0_8, %c0_9] : memref<3x1xf32, #tpu.memory_space<vmem>>, vector<3x1xf32>
    %33 = vector.broadcast %32 : vector<3x1xf32> to vector<3x1280xf32>
    %34 = arith.addf %31, %33 : vector<3x1280xf32>
    %c0_10 = arith.constant 0 : index
    %c0_11 = arith.constant 0 : index
    %35 = vector.load %arg6[%c0_10, %c0_11] : memref<3x1280xf32, #tpu.memory_space<vmem>>, vector<3x1280xf32>
    tpu.vector_store %arg6[%c0_10, %c0_11], %34 {strides = array<i32>} : memref<3x1280xf32, #tpu.memory_space<vmem>>, vector<3x1280xf32>,
    return
  }
  func.func @transform_0(%arg0: i32) -> (i32, i32) {
    %c0_i32 = arith.constant 0 : i32
    %c0_i32_0 = arith.constant 0 : i32
    return %c0_i32, %arg0 : i32, i32
  }
  func.func @transform_1(%arg0: i32) -> (i32, i32) {
    %c0_i32 = arith.constant 0 : i32
    %c0_i32_0 = arith.constant 0 : i32
    %c0_i32_1 = arith.constant 0 : i32
    return %c0_i32, %c0_i32_0 : i32, i32
  }
  func.func @transform_2(%arg0: i32) -> (i32, i32) {
    %c0_i32 = arith.constant 0 : i32
    %c0_i32_0 = arith.constant 0 : i32
    %c0_i32_1 = arith.constant 0 : i32
    return %c0_i32, %c0_i32_0 : i32, i32
  }
  func.func @transform_3(%arg0: i32) -> (i32, i32) {
    %c0_i32 = arith.constant 0 : i32
    %c0_i32_0 = arith.constant 0 : i32
    %c0_i32_1 = arith.constant 0 : i32
    return %c0_i32, %c0_i32_0 : i32, i32
  }
  func.func @transform_4(%arg0: i32) -> (i32, i32) {
    %c0_i32 = arith.constant 0 : i32
    %c0_i32_0 = arith.constant 0 : i32
    %c0_i32_1 = arith.constant 0 : i32
    return %c0_i32, %c0_i32_0 : i32, i32
  }
  func.func @transform_5(%arg0: i32) -> (i32, i32) {
    %c0_i32 = arith.constant 0 : i32
    %c0_i32_0 = arith.constant 0 : i32
    return %c0_i32, %arg0 : i32, i32
  }
}

</mosaic_0001>

<llo_original>
// kernel: ann_one_hid_feature_major.1
$region0: #{ann_one_hid_feature_major.1}
  #allocation0 [shape = 'u32[]', space=smem, size = 0x4, offset = 0x4, fixed_abs, tag = 'smem constant byte address 0x4 - core index']
  #allocation1 [shape = 'u32[144,128]{1,0:T(1,128)}', space=vmem, size = 0x12000, scoped, tag = 'internal scratch']
  %s0 = inlined_call_operand.hbm [shape: f32[4,2560], index: 0, kind: input, shape index: {}]
  %s1 = inlined_call_operand.vmem [shape: f32[20,4], index: 1, kind: input, shape index: {}]
  %s2 = inlined_call_operand.vmem [shape: f32[20,1], index: 2, kind: input, shape index: {}]
  %s3 = inlined_call_operand.vmem [shape: f32[3,20], index: 3, kind: input, shape index: {}]
  %s4 = inlined_call_operand.vmem [shape: f32[3,1], index: 4, kind: input, shape index: {}]
  %s5 = inlined_call_operand.hbm [shape: f32[3,2560], index: 5, kind: output, shape index: {}]
  %s6 = sld [smem:[#allocation0]]
  $region57: #{ann_one_hid_feature_major.1} parent=0
    _
  %s8 = ssub.s32 1, %s6
  %s9 = scalar_select 0, %s8, %s6
  $region1: #{ann_one_hid_feature_major.1} parent=0
    #allocation2 [shape = 'u8[40960]{0}', space=vmem, size = 0xa000, scoped, tag = 'input window, operand 0']
    #allocation3 [shape = 's32[2]{0}', space=sflag, size = 0x8, scoped, tag = 'scoped memory for ann_one_hid_feature_major.1']
    #allocation4 [shape = 's32[2]{0}', space=sflag, size = 0x8, scoped, tag = 'scoped memory for ann_one_hid_feature_major.1']
    #allocation5 [shape = 'u8[40960]{0}', space=vmem, size = 0xa000, scoped, tag = 'output window, operand 0']
    %10 = vsyncpa [#allocation3], 0
    %s11 = scalar_lea.sflag [#allocation3], 1
    %12 = vsyncpa %s11, 0
    %13 = vsyncpa [#allocation4], 0
    %s14 = scalar_lea.sflag [#allocation4], 1
    %15 = vsyncpa %s14, 0
    loop: start=0, step=1, limit=4
    $region2: #{ann_one_hid_feature_major.1} parent=1 // loop_pre_header
      _
    $region3: #{ann_one_hid_feature_major.1} parent=1 // loop_header
      %s17 = sphi 0, %s21
      %p18 = scmp.ge.s32.totalorder %s17, 4
      %s27 = sphi 0, %s29
      %s30 = sphi 0, %s27
      %s31 = sphi 0, %s30
      %s47 = sphi 0, %s31
      %s51 = sphi 0, %s51
      %s53 = sphi 0, %s51
      %s54 = sphi 0, %s53
      %s68 = sphi 0, %s54
      %s72 = sphi 0, %s72
      %s74 = sphi 0, %s72
      %s75 = sphi 0, %s74
      %s89 = sphi 0, %s75
      %s93 = sphi 0, %s93
      %s95 = sphi 0, %s93
      %s96 = sphi 0, %s95
      %s110 = sphi 0, %s96
      %s114 = sphi 0, %s114
      %s116 = sphi 0, %s114
      %s117 = sphi 0, %s116
      %s131 = sphi 0, %s117
      %s137 = sphi 0, %s139
      %s140 = sphi 0, %s137
      %s141 = sphi 0, %s140
      %s157 = sphi 0, %s141
    $region4: #{ann_one_hid_feature_major.1} parent=1 // loop_header_branch
      %20 = sbr.rel (%p18) target = $region8
    $region5: #{ann_one_hid_feature_major.1} parent=1 // loop_body
      %s22 = ssub.s32 %s17, 1
      %s23 = ssub.s32 %s17, 2
      %s24 = sadd.s32 %s17, 1
      %s25 = ssub.s32 %s17, %s24
      %p26 = scmp.eq.s32.totalorder %s25, 0
      %s28 = sadd.s32 %s27, 1
      %s29 = scalar_select %p26, %s27, %s28
      %p32 = pneg %p26
      %p33 = scmp.eq.s32.totalorder %s17, 1
      %p34 = por %p32, %p33
      %p35 = scmp.ne.s32.totalorder %s27, %s30
      %p36 = scmp.eq.s32.totalorder %s17, 0
      %p37 = por %p35, %p36
      %p38 = scmp.ne.s32.totalorder %s27, %s30
      %p39 = scmp.eq.s32.totalorder %s22, 1
      %p40 = por %p38, %p39
      %p41 = scmp.ne.s32.totalorder %s30, %s31
      %p42 = scmp.eq.s32.totalorder %s22, 0
      %p43 = por %p41, %p42
      %p44 = scmp.ne.s32.totalorder %s30, %s31
      %p45 = scmp.eq.s32.totalorder %s23, 1
      %p46 = por %p44, %p45
      %p48 = scmp.ne.s32.totalorder %s31, %s47
      %p49 = scmp.eq.s32.totalorder %s23, 0
      %p50 = por %p48, %p49
      %s52 = sadd.s32 %s51, 1
      %p55 = scmp.eq.s32.totalorder %s17, 1
      %p56 = scmp.ne.s32.totalorder %s51, %s53
      %p57 = scmp.eq.s32.totalorder %s17, 0
      %p58 = por %p56, %p57
      %p59 = scmp.ne.s32.totalorder %s51, %s53
      %p60 = scmp.eq.s32.totalorder %s22, 1
      %p61 = por %p59, %p60
      %p62 = scmp.ne.s32.totalorder %s53, %s54
      %p63 = scmp.eq.s32.totalorder %s22, 0
      %p64 = por %p62, %p63
      %p65 = scmp.ne.s32.totalorder %s53, %s54
      %p66 = scmp.eq.s32.totalorder %s23, 1
      %p67 = por %p65, %p66
      %p69 = scmp.ne.s32.totalorder %s54, %s68
      %p70 = scmp.eq.s32.totalorder %s23, 0
      %p71 = por %p69, %p70
      %s73 = sadd.s32 %s72, 1
      %p76 = scmp.eq.s32.totalorder %s17, 1
      %p77 = scmp.ne.s32.totalorder %s72, %s74
      %p78 = scmp.eq.s32.totalorder %s17, 0
      %p79 = por %p77, %p78
      %p80 = scmp.ne.s32.totalorder %s72, %s74
      %p81 = scmp.eq.s32.totalorder %s22, 1
      %p82 = por %p80, %p81
      %p83 = scmp.ne.s32.totalorder %s74, %s75
      %p84 = scmp.eq.s32.totalorder %s22, 0
      %p85 = por %p83, %p84
      %p86 = scmp.ne.s32.totalorder %s74, %s75
      %p87 = scmp.eq.s32.totalorder %s23, 1
      %p88 = por %p86, %p87
      %p90 = scmp.ne.s32.totalorder %s75, %s89
      %p91 = scmp.eq.s32.totalorder %s23, 0
      %p92 = por %p90, %p91
      %s94 = sadd.s32 %s93, 1
      %p97 = scmp.eq.s32.totalorder %s17, 1
      %p98 = scmp.ne.s32.totalorder %s93, %s95
      %p99 = scmp.eq.s32.totalorder %s17, 0
      %p100 = por %p98, %p99
      %p101 = scmp.ne.s32.totalorder %s93, %s95
      %p102 = scmp.eq.s32.totalorder %s22, 1
      %p103 = por %p101, %p102
      %p104 = scmp.ne.s32.totalorder %s95, %s96
      %p105 = scmp.eq.s32.totalorder %s22, 0
      %p106 = por %p104, %p105
      %p107 = scmp.ne.s32.totalorder %s95, %s96
      %p108 = scmp.eq.s32.totalorder %s23, 1
      %p109 = por %p107, %p108
      %p111 = scmp.ne.s32.totalorder %s96, %s110
      %p112 = scmp.eq.s32.totalorder %s23, 0
      %p113 = por %p111, %p112
      %s115 = sadd.s32 %s114, 1
      %p118 = scmp.eq.s32.totalorder %s17, 1
      %p119 = scmp.ne.s32.totalorder %s114, %s116
      %p120 = scmp.eq.s32.totalorder %s17, 0
      %p121 = por %p119, %p120
      %p122 = scmp.ne.s32.totalorder %s114, %s116
      %p123 = scmp.eq.s32.totalorder %s22, 1
      %p124 = por %p122, %p123
      %p125 = scmp.ne.s32.totalorder %s116, %s117
      %p126 = scmp.eq.s32.totalorder %s22, 0
      %p127 = por %p125, %p126
      %p128 = scmp.ne.s32.totalorder %s116, %s117
      %p129 = scmp.eq.s32.totalorder %s23, 1
      %p130 = por %p128, %p129
      %p132 = scmp.ne.s32.totalorder %s117, %s131
      %p133 = scmp.eq.s32.totalorder %s23, 0
      %p134 = por %p132, %p133
      %s135 = ssub.s32 %s17, %s24
      %p136 = scmp.eq.s32.totalorder %s135, 0
      %s138 = sadd.s32 %s137, 1
      %s139 = scalar_select %p136, %s137, %s138
      %p142 = pneg %p136
      %p143 = scmp.eq.s32.totalorder %s17, 1
      %p144 = por %p142, %p143
      %p145 = scmp.ne.s32.totalorder %s137, %s140
      %p146 = scmp.eq.s32.totalorder %s17, 0
      %p147 = por %p145, %p146
      %p148 = scmp.ne.s32.totalorder %s137, %s140
      %p149 = scmp.eq.s32.totalorder %s22, 1
      %p150 = por %p148, %p149
      %p151 = scmp.ne.s32.totalorder %s140, %s141
      %p152 = scmp.eq.s32.totalorder %s22, 0
      %p153 = por %p151, %p152
      %p154 = scmp.ne.s32.totalorder %s140, %s141
      %p155 = scmp.eq.s32.totalorder %s23, 1
      %p156 = por %p154, %p155
      %p158 = scmp.ne.s32.totalorder %s141, %s157
      %p159 = scmp.eq.s32.totalorder %s23, 0
      %p160 = por %p158, %p159
      %p161 = scmp.le.s32.totalorder 1, %s17
      %p162 = scmp.lt.s32.totalorder %s17, 3
      %p163 = pnand %p161, %p162
      %p164 = pneg %p163
      // Predicated region
      $region9: #{ann_one_hid_feature_major.1} parent=5 // pred_check
        _
      $region10: #{ann_one_hid_feature_major.1} parent=5 // pred_check_branch
        %166 = sbr.rel (%p163) target = $region12
      $region11: #{ann_one_hid_feature_major.1} parent=5 // pred_region
        %s167 = ssub.s32 %s17, 1
        // Predicated region
        $region13: #{ann_one_hid_feature_major.1} parent=11 // pred_check
          %p168 = pneg %p64
        $region14: #{ann_one_hid_feature_major.1} parent=11 // pred_check_branch
          %170 = sbr.rel (%p168) target = $region16
        $region15: #{ann_one_hid_feature_major.1} parent=11 // pred_region
          _
        $region16: #{ann_one_hid_feature_major.1} parent=11 // pred_fallthru
          _
        // Predicated region
        $region17: #{ann_one_hid_feature_major.1} parent=11 // pred_check
          %p171 = pneg %p85
        $region18: #{ann_one_hid_feature_major.1} parent=11 // pred_check_branch
          %173 = sbr.rel (%p171) target = $region20
        $region19: #{ann_one_hid_feature_major.1} parent=11 // pred_region
          _
        $region20: #{ann_one_hid_feature_major.1} parent=11 // pred_fallthru
          _
        // Predicated region
        $region21: #{ann_one_hid_feature_major.1} parent=11 // pred_check
          %p174 = pneg %p106
        $region22: #{ann_one_hid_feature_major.1} parent=11 // pred_check_branch
          %176 = sbr.rel (%p174) target = $region24
        $region23: #{ann_one_hid_feature_major.1} parent=11 // pred_region
          _
        $region24: #{ann_one_hid_feature_major.1} parent=11 // pred_fallthru
          _
        // Predicated region
        $region25: #{ann_one_hid_feature_major.1} parent=11 // pred_check
          %p177 = pneg %p127
        $region26: #{ann_one_hid_feature_major.1} parent=11 // pred_check_branch
          %179 = sbr.rel (%p177) target = $region28
        $region27: #{ann_one_hid_feature_major.1} parent=11 // pred_region
          _
        $region28: #{ann_one_hid_feature_major.1} parent=11 // pred_fallthru
          _
      $region12: #{ann_one_hid_feature_major.1} parent=5 // pred_fallthru
        _
      %p180 = scmp.lt.s32.totalorder %s17, 2
      // Predicated region
      $region29: #{ann_one_hid_feature_major.1} parent=5 // pred_check
        %p181 = pneg %p180
      $region30: #{ann_one_hid_feature_major.1} parent=5 // pred_check_branch
        %183 = sbr.rel (%p181) target = $region32
      $region31: #{ann_one_hid_feature_major.1} parent=5 // pred_region
        // Predicated region
        $region33: #{ann_one_hid_feature_major.1} parent=31 // pred_check
          %p184 = pneg %p37
        $region34: #{ann_one_hid_feature_major.1} parent=31 // pred_check_branch
          %186 = sbr.rel (%p184) target = $region36
        $region35: #{ann_one_hid_feature_major.1} parent=31 // pred_region
          %s187 = sand.u32 %s27, 1
          %s188 = scalar_lea.sflag [#allocation3], %s187
          %s189 = sand.u32 %s27, 1
          %s190 = smul.addr %s189, 40
          %s191 = scalar_lea.vmem [#allocation2], %s190
          %s192 = smul.u32 10, %s17
          %s194 = ssub.s32 640, 640
          %195 = vsyncadd %s188, %s194
          %s196 = smul.addr %s192, 64
          %s197 = scalar_lea.hbm %s0, %s196
          %s199 = sshll.u32 %s191, 4
          %s200 = int_to_ptr.vmem [resolvable:$true] %s199
          %202 = dma.hbm_to_vmem [thread:$0]  %s197, 640, %s200, %s188
        $region36: #{ann_one_hid_feature_major.1} parent=31 // pred_fallthru
          _
      $region32: #{ann_one_hid_feature_major.1} parent=5 // pred_fallthru
        _
      %p203 = scmp.le.s32.totalorder 1, %s17
      %p204 = scmp.lt.s32.totalorder %s17, 3
      %p205 = pnand %p203, %p204
      %p206 = pneg %p205
      // Predicated region
      $region37: #{ann_one_hid_feature_major.1} parent=5 // pred_check
        _
      $region38: #{ann_one_hid_feature_major.1} parent=5 // pred_check_branch
        %208 = sbr.rel (%p205) target = $region40
      $region39: #{ann_one_hid_feature_major.1} parent=5 // pred_region
        %s209 = ssub.s32 %s17, 1
        %s210 = sand.u32 %s30, 1
        %s211 = scalar_lea.sflag [#allocation3], %s210
        %s212 = sand.u32 %s30, 1
        %s213 = smul.addr %s212, 40
        %s214 = scalar_lea.vmem [#allocation2], %s213
        // Predicated region
        $region41: #{ann_one_hid_feature_major.1} parent=39 // pred_check
          %p215 = pneg %p43
        $region42: #{ann_one_hid_feature_major.1} parent=39 // pred_check_branch
          %217 = sbr.rel (%p215) target = $region44
        $region43: #{ann_one_hid_feature_major.1} parent=39 // pred_region
          %218 = dma.done %s211, 640
        $region44: #{ann_one_hid_feature_major.1} parent=39 // pred_fallthru
          _
        %s219 = sand.u32 %s30, 1
        %s220 = scalar_lea.sflag [#allocation3], %s219
        %s221 = sand.u32 %s30, 1
        %s222 = smul.addr %s221, 40
        %s223 = scalar_lea.vmem [#allocation2], %s222
        %p224 = pneg %p43
        %p225 = pneg %p40
        %p226 = pneg %p64
        %p227 = pneg %p61
        %p228 = pneg %p85
        %p229 = pneg %p82
        %p230 = pneg %p106
        %p231 = pneg %p103
        %p232 = pneg %p127
        %p233 = pneg %p124
        %p234 = pneg %p153
        %p235 = pneg %p150
        %s236 = sand.u32 %s140, 1
        %s237 = scalar_lea.sflag [#allocation4], %s236
        %s238 = sand.u32 %s140, 1
        %s239 = smul.addr %s238, 40
        %s240 = scalar_lea.vmem [#allocation5], %s239
        %s241 = smul.u32 10, %s22
        %s242 = smul.u32 10, %s22
        %v243 = vld [vmem:[%s214] sm:$0xff]
        %v244 = vld [vmem:[%s214 + $0x8] sm:$0xff]
        %v245 = vld [vmem:[%s214 + $0x10] sm:$0xff]
        %v246 = vld [vmem:[%s214 + $0x18] sm:$0xff]
        %v247 = vld [vmem:[%s214 + $0x20] sm:$0xff]
        %v248 = vld [vmem:[%s1] sm:$0xff]
        %v249 = vld [vmem:[%s1 + $0x8] sm:$0xff]
        %v250 = vld [vmem:[%s1 + $0x10] sm:$0xf]
        %v251 = vld [vmem:[%s2] sm:$0xff]
        %v252 = vld [vmem:[%s2 + $0x8] sm:$0xff]
        %v253 = vld [vmem:[%s2 + $0x10] sm:$0xf]
        %255 = vset.pattern.permute.xlu0 0
        %256 = vperm.xlu0 %255, %v248
        %v257 = vpop.permute.xlu0 %256
        %260 = vset.pattern.permute.xlu0 0
        %261 = vperm.xlu0 %260, %v249
        %v262 = vpop.permute.xlu0 %261
        %265 = vset.pattern.permute.xlu0 0
        %266 = vperm.xlu0 %265, %v250
        %v267 = vpop.permute.xlu0 %266
        %v274 = vlaneseq
        %v275 = vshrl.u32 %v274, 7
        %v276 = vsub.s32 0, %v275
        %v277 = vrot.slane %v243, %v276
        %v278 = vlaneseq
        %v279 = vshrl.u32 %v278, 7
        %v280 = vsub.s32 4, %v279
        %v281 = vrot.slane %v243, %v280
        %v282 = vlaneseq
        %v283 = vshrl.u32 %v282, 7
        %v284 = vsub.s32 0, %v283
        %v285 = vrot.slane %v244, %v284
        %v286 = vlaneseq
        %v287 = vshrl.u32 %v286, 7
        %v288 = vsub.s32 4, %v287
        %v289 = vrot.slane %v244, %v288
        %v290 = vlaneseq
        %v291 = vshrl.u32 %v290, 7
        %v292 = vsub.s32 0, %v291
        %v293 = vrot.slane %v245, %v292
        %v294 = vlaneseq
        %v295 = vshrl.u32 %v294, 7
        %v296 = vsub.s32 4, %v295
        %v297 = vrot.slane %v245, %v296
        %v298 = vlaneseq
        %v299 = vshrl.u32 %v298, 7
        %v300 = vsub.s32 0, %v299
        %v301 = vrot.slane %v246, %v300
        %v302 = vlaneseq
        %v303 = vshrl.u32 %v302, 7
        %v304 = vsub.s32 4, %v303
        %v305 = vrot.slane %v246, %v304
        %v306 = vlaneseq
        %v307 = vshrl.u32 %v306, 7
        %v308 = vsub.s32 0, %v307
        %v309 = vrot.slane %v247, %v308
        %v310 = vlaneseq
        %v311 = vshrl.u32 %v310, 7
        %v312 = vsub.s32 4, %v311
        %v313 = vrot.slane %v247, %v312
        %v324 = vlaneseq
        %v325 = vshrl.u32 %v324, 7
        %v326 = vsub.s32 0, %v325
        %v327 = vrot.slane %v277, %v326
        %v328 = vlaneseq
        %v329 = vshrl.u32 %v328, 7
        %v330 = vsub.s32 0, %v329
        %v331 = vrot.slane %v281, %v330
        %v332 = vlaneseq
        %v333 = vshrl.u32 %v332, 7
        %v334 = vsub.s32 0, %v333
        %v335 = vrot.slane %v285, %v334
        %v336 = vlaneseq
        %v337 = vshrl.u32 %v336, 7
        %v338 = vsub.s32 0, %v337
        %v339 = vrot.slane %v289, %v338
        %v340 = vlaneseq
        %v341 = vshrl.u32 %v340, 7
        %v342 = vsub.s32 0, %v341
        %v343 = vrot.slane %v293, %v342
        %v344 = vlaneseq
        %v345 = vshrl.u32 %v344, 7
        %v346 = vsub.s32 0, %v345
        %v347 = vrot.slane %v297, %v346
        %v348 = vlaneseq
        %v349 = vshrl.u32 %v348, 7
        %v350 = vsub.s32 0, %v349
        %v351 = vrot.slane %v301, %v350
        %v352 = vlaneseq
        %v353 = vshrl.u32 %v352, 7
        %v354 = vsub.s32 0, %v353
        %v355 = vrot.slane %v305, %v354
        %v356 = vlaneseq
        %v357 = vshrl.u32 %v356, 7
        %v358 = vsub.s32 0, %v357
        %v359 = vrot.slane %v309, %v358
        %v360 = vlaneseq
        %v361 = vshrl.u32 %v360, 7
        %v362 = vsub.s32 0, %v361
        %v363 = vrot.slane %v313, %v362
        %v364 = vmul.f32 %v257, %v327
        %v365 = vmul.f32 %v257, %v331
        %v366 = vmul.f32 %v257, %v335
        %v367 = vmul.f32 %v257, %v339
        %v368 = vmul.f32 %v257, %v343
        %v369 = vmul.f32 %v257, %v347
        %v370 = vmul.f32 %v257, %v351
        %v371 = vmul.f32 %v257, %v355
        %v372 = vmul.f32 %v257, %v359
        %v373 = vmul.f32 %v257, %v363
        %v374 = vmul.f32 %v262, %v327
        %v375 = vmul.f32 %v262, %v331
        %v376 = vmul.f32 %v262, %v335
        %v377 = vmul.f32 %v262, %v339
        %v378 = vmul.f32 %v262, %v343
        %v379 = vmul.f32 %v262, %v347
        %v380 = vmul.f32 %v262, %v351
        %v381 = vmul.f32 %v262, %v355
        %v382 = vmul.f32 %v262, %v359
        %v383 = vmul.f32 %v262, %v363
        %v384 = vmul.f32 %v267, %v327
        %v385 = vmul.f32 %v267, %v331
        %v386 = vmul.f32 %v267, %v335
        %v387 = vmul.f32 %v267, %v339
        %v388 = vmul.f32 %v267, %v343
        %v389 = vmul.f32 %v267, %v347
        %v390 = vmul.f32 %v267, %v351
        %v391 = vmul.f32 %v267, %v355
        %v392 = vmul.f32 %v267, %v359
        %v393 = vmul.f32 %v267, %v363
        %395 = vset.pattern.permute.xlu0 0
        %396 = vperm.xlu0 %395, %v251
        %v397 = vpop.permute.xlu0 %396
        %400 = vset.pattern.permute.xlu0 0
        %401 = vperm.xlu0 %400, %v252
        %v402 = vpop.permute.xlu0 %401
        %405 = vset.pattern.permute.xlu0 0
        %406 = vperm.xlu0 %405, %v253
        %v407 = vpop.permute.xlu0 %406
        %v409 = vadd.f32 %v397, %v364
        %v410 = vadd.f32 %v397, %v365
        %v411 = vadd.f32 %v397, %v366
        %v412 = vadd.f32 %v397, %v367
        %v413 = vadd.f32 %v397, %v368
        %v414 = vadd.f32 %v397, %v369
        %v415 = vadd.f32 %v397, %v370
        %v416 = vadd.f32 %v397, %v371
        %v417 = vadd.f32 %v397, %v372
        %v418 = vadd.f32 %v397, %v373
        %v419 = vadd.f32 %v402, %v374
        %v420 = vadd.f32 %v402, %v375
        %v421 = vadd.f32 %v402, %v376
        %v422 = vadd.f32 %v402, %v377
        %v423 = vadd.f32 %v402, %v378
        %v424 = vadd.f32 %v402, %v379
        %v425 = vadd.f32 %v402, %v380
        %v426 = vadd.f32 %v402, %v381
        %v427 = vadd.f32 %v402, %v382
        %v428 = vadd.f32 %v402, %v383
        %v429 = vadd.f32 %v407, %v384
        %v430 = vadd.f32 %v407, %v385
        %v431 = vadd.f32 %v407, %v386
        %v432 = vadd.f32 %v407, %v387
        %v433 = vadd.f32 %v407, %v388
        %v434 = vadd.f32 %v407, %v389
        %v435 = vadd.f32 %v407, %v390
        %v436 = vadd.f32 %v407, %v391
        %v437 = vadd.f32 %v407, %v392
        %v438 = vadd.f32 %v407, %v393
        %439 = vset.pattern.permute.xlu0 1
        %440 = vperm.xlu0 %439, %v248
        %v441 = vpop.permute.xlu0 %440
        %443 = vset.pattern.permute.xlu0 1
        %444 = vperm.xlu0 %443, %v249
        %v445 = vpop.permute.xlu0 %444
        %447 = vset.pattern.permute.xlu0 1
        %448 = vperm.xlu0 %447, %v250
        %v449 = vpop.permute.xlu0 %448
        %v451 = vlaneseq
        %v452 = vshrl.u32 %v451, 7
        %v453 = vsub.s32 1, %v452
        %v454 = vrot.slane %v243, %v453
        %v455 = vlaneseq
        %v456 = vshrl.u32 %v455, 7
        %v457 = vsub.s32 5, %v456
        %v458 = vrot.slane %v243, %v457
        %v459 = vlaneseq
        %v460 = vshrl.u32 %v459, 7
        %v461 = vsub.s32 1, %v460
        %v462 = vrot.slane %v244, %v461
        %v463 = vlaneseq
        %v464 = vshrl.u32 %v463, 7
        %v465 = vsub.s32 5, %v464
        %v466 = vrot.slane %v244, %v465
        %v467 = vlaneseq
        %v468 = vshrl.u32 %v467, 7
        %v469 = vsub.s32 1, %v468
        %v470 = vrot.slane %v245, %v469
        %v471 = vlaneseq
        %v472 = vshrl.u32 %v471, 7
        %v473 = vsub.s32 5, %v472
        %v474 = vrot.slane %v245, %v473
        %v475 = vlaneseq
        %v476 = vshrl.u32 %v475, 7
        %v477 = vsub.s32 1, %v476
        %v478 = vrot.slane %v246, %v477
        %v479 = vlaneseq
        %v480 = vshrl.u32 %v479, 7
        %v481 = vsub.s32 5, %v480
        %v482 = vrot.slane %v246, %v481
        %v483 = vlaneseq
        %v484 = vshrl.u32 %v483, 7
        %v485 = vsub.s32 1, %v484
        %v486 = vrot.slane %v247, %v485
        %v487 = vlaneseq
        %v488 = vshrl.u32 %v487, 7
        %v489 = vsub.s32 5, %v488
        %v490 = vrot.slane %v247, %v489
        %v501 = vlaneseq
        %v502 = vshrl.u32 %v501, 7
        %v503 = vsub.s32 1, %v502
        %v504 = vrot.slane %v454, %v503
        %v505 = vlaneseq
        %v506 = vshrl.u32 %v505, 7
        %v507 = vsub.s32 1, %v506
        %v508 = vrot.slane %v458, %v507
        %v509 = vlaneseq
        %v510 = vshrl.u32 %v509, 7
        %v511 = vsub.s32 1, %v510
        %v512 = vrot.slane %v462, %v511
        %v513 = vlaneseq
        %v514 = vshrl.u32 %v513, 7
        %v515 = vsub.s32 1, %v514
        %v516 = vrot.slane %v466, %v515
        %v517 = vlaneseq
        %v518 = vshrl.u32 %v517, 7
        %v519 = vsub.s32 1, %v518
        %v520 = vrot.slane %v470, %v519
        %v521 = vlaneseq
        %v522 = vshrl.u32 %v521, 7
        %v523 = vsub.s32 1, %v522
        %v524 = vrot.slane %v474, %v523
        %v525 = vlaneseq
        %v526 = vshrl.u32 %v525, 7
        %v527 = vsub.s32 1, %v526
        %v528 = vrot.slane %v478, %v527
        %v529 = vlaneseq
        %v530 = vshrl.u32 %v529, 7
        %v531 = vsub.s32 1, %v530
        %v532 = vrot.slane %v482, %v531
        %v533 = vlaneseq
        %v534 = vshrl.u32 %v533, 7
        %v535 = vsub.s32 1, %v534
        %v536 = vrot.slane %v486, %v535
        %v537 = vlaneseq
        %v538 = vshrl.u32 %v537, 7
        %v539 = vsub.s32 1, %v538
        %v540 = vrot.slane %v490, %v539
        %v541 = vmul.f32 %v441, %v504
        %v542 = vmul.f32 %v441, %v508
        %v543 = vmul.f32 %v441, %v512
        %v544 = vmul.f32 %v441, %v516
        %v545 = vmul.f32 %v441, %v520
        %v546 = vmul.f32 %v441, %v524
        %v547 = vmul.f32 %v441, %v528
        %v548 = vmul.f32 %v441, %v532
        %v549 = vmul.f32 %v441, %v536
        %v550 = vmul.f32 %v441, %v540
        %v551 = vmul.f32 %v445, %v504
        %v552 = vmul.f32 %v445, %v508
        %v553 = vmul.f32 %v445, %v512
        %v554 = vmul.f32 %v445, %v516
        %v555 = vmul.f32 %v445, %v520
        %v556 = vmul.f32 %v445, %v524
        %v557 = vmul.f32 %v445, %v528
        %v558 = vmul.f32 %v445, %v532
        %v559 = vmul.f32 %v445, %v536
        %v560 = vmul.f32 %v445, %v540
        %v561 = vmul.f32 %v449, %v504
        %v562 = vmul.f32 %v449, %v508
        %v563 = vmul.f32 %v449, %v512
        %v564 = vmul.f32 %v449, %v516
        %v565 = vmul.f32 %v449, %v520
        %v566 = vmul.f32 %v449, %v524
        %v567 = vmul.f32 %v449, %v528
        %v568 = vmul.f32 %v449, %v532
        %v569 = vmul.f32 %v449, %v536
        %v570 = vmul.f32 %v449, %v540
        %v571 = vadd.f32 %v409, %v541
        %v572 = vadd.f32 %v410, %v542
        %v573 = vadd.f32 %v411, %v543
        %v574 = vadd.f32 %v412, %v544
        %v575 = vadd.f32 %v413, %v545
        %v576 = vadd.f32 %v414, %v546
        %v577 = vadd.f32 %v415, %v547
        %v578 = vadd.f32 %v416, %v548
        %v579 = vadd.f32 %v417, %v549
        %v580 = vadd.f32 %v418, %v550
        %v581 = vadd.f32 %v419, %v551
        %v582 = vadd.f32 %v420, %v552
        %v583 = vadd.f32 %v421, %v553
        %v584 = vadd.f32 %v422, %v554
        %v585 = vadd.f32 %v423, %v555
        %v586 = vadd.f32 %v424, %v556
        %v587 = vadd.f32 %v425, %v557
        %v588 = vadd.f32 %v426, %v558
        %v589 = vadd.f32 %v427, %v559
        %v590 = vadd.f32 %v428, %v560
        %v591 = vadd.f32 %v429, %v561
        %v592 = vadd.f32 %v430, %v562
        %v593 = vadd.f32 %v431, %v563
        %v594 = vadd.f32 %v432, %v564
        %v595 = vadd.f32 %v433, %v565
        %v596 = vadd.f32 %v434, %v566
        %v597 = vadd.f32 %v435, %v567
        %v598 = vadd.f32 %v436, %v568
        %v599 = vadd.f32 %v437, %v569
        %v600 = vadd.f32 %v438, %v570
        %601 = vset.pattern.permute.xlu0 2
        %602 = vperm.xlu0 %601, %v248
        %v603 = vpop.permute.xlu0 %602
        %605 = vset.pattern.permute.xlu0 2
        %606 = vperm.xlu0 %605, %v249
        %v607 = vpop.permute.xlu0 %606
        %609 = vset.pattern.permute.xlu0 2
        %610 = vperm.xlu0 %609, %v250
        %v611 = vpop.permute.xlu0 %610
        %v613 = vlaneseq
        %v614 = vshrl.u32 %v613, 7
        %v615 = vsub.s32 2, %v614
        %v616 = vrot.slane %v243, %v615
        %v617 = vlaneseq
        %v618 = vshrl.u32 %v617, 7
        %v619 = vsub.s32 6, %v618
        %v620 = vrot.slane %v243, %v619
        %v621 = vlaneseq
        %v622 = vshrl.u32 %v621, 7
        %v623 = vsub.s32 2, %v622
        %v624 = vrot.slane %v244, %v623
        %v625 = vlaneseq
        %v626 = vshrl.u32 %v625, 7
        %v627 = vsub.s32 6, %v626
        %v628 = vrot.slane %v244, %v627
        %v629 = vlaneseq
        %v630 = vshrl.u32 %v629, 7
        %v631 = vsub.s32 2, %v630
        %v632 = vrot.slane %v245, %v631
        %v633 = vlaneseq
        %v634 = vshrl.u32 %v633, 7
        %v635 = vsub.s32 6, %v634
        %v636 = vrot.slane %v245, %v635
        %v637 = vlaneseq
        %v638 = vshrl.u32 %v637, 7
        %v639 = vsub.s32 2, %v638
        %v640 = vrot.slane %v246, %v639
        %v641 = vlaneseq
        %v642 = vshrl.u32 %v641, 7
        %v643 = vsub.s32 6, %v642
        %v644 = vrot.slane %v246, %v643
        %v645 = vlaneseq
        %v646 = vshrl.u32 %v645, 7
        %v647 = vsub.s32 2, %v646
        %v648 = vrot.slane %v247, %v647
        %v649 = vlaneseq
        %v650 = vshrl.u32 %v649, 7
        %v651 = vsub.s32 6, %v650
        %v652 = vrot.slane %v247, %v651
        %v663 = vlaneseq
        %v664 = vshrl.u32 %v663, 7
        %v665 = vsub.s32 2, %v664
        %v666 = vrot.slane %v616, %v665
        %v667 = vlaneseq
        %v668 = vshrl.u32 %v667, 7
        %v669 = vsub.s32 2, %v668
        %v670 = vrot.slane %v620, %v669
        %v671 = vlaneseq
        %v672 = vshrl.u32 %v671, 7
        %v673 = vsub.s32 2, %v672
        %v674 = vrot.slane %v624, %v673
        %v675 = vlaneseq
        %v676 = vshrl.u32 %v675, 7
        %v677 = vsub.s32 2, %v676
        %v678 = vrot.slane %v628, %v677
        %v679 = vlaneseq
        %v680 = vshrl.u32 %v679, 7
        %v681 = vsub.s32 2, %v680
        %v682 = vrot.slane %v632, %v681
        %v683 = vlaneseq
        %v684 = vshrl.u32 %v683, 7
        %v685 = vsub.s32 2, %v684
        %v686 = vrot.slane %v636, %v685
        %v687 = vlaneseq
        %v688 = vshrl.u32 %v687, 7
        %v689 = vsub.s32 2, %v688
        %v690 = vrot.slane %v640, %v689
        %v691 = vlaneseq
        %v692 = vshrl.u32 %v691, 7
        %v693 = vsub.s32 2, %v692
        %v694 = vrot.slane %v644, %v693
        %v695 = vlaneseq
        %v696 = vshrl.u32 %v695, 7
        %v697 = vsub.s32 2, %v696
        %v698 = vrot.slane %v648, %v697
        %v699 = vlaneseq
        %v700 = vshrl.u32 %v699, 7
        %v701 = vsub.s32 2, %v700
        %v702 = vrot.slane %v652, %v701
        %v703 = vmul.f32 %v603, %v666
        %v704 = vmul.f32 %v603, %v670
        %v705 = vmul.f32 %v603, %v674
        %v706 = vmul.f32 %v603, %v678
        %v707 = vmul.f32 %v603, %v682
        %v708 = vmul.f32 %v603, %v686
        %v709 = vmul.f32 %v603, %v690
        %v710 = vmul.f32 %v603, %v694
        %v711 = vmul.f32 %v603, %v698
        %v712 = vmul.f32 %v603, %v702
        %v713 = vmul.f32 %v607, %v666
        %v714 = vmul.f32 %v607, %v670
        %v715 = vmul.f32 %v607, %v674
        %v716 = vmul.f32 %v607, %v678
        %v717 = vmul.f32 %v607, %v682
        %v718 = vmul.f32 %v607, %v686
        %v719 = vmul.f32 %v607, %v690
        %v720 = vmul.f32 %v607, %v694
        %v721 = vmul.f32 %v607, %v698
        %v722 = vmul.f32 %v607, %v702
        %v723 = vmul.f32 %v611, %v666
        %v724 = vmul.f32 %v611, %v670
        %v725 = vmul.f32 %v611, %v674
        %v726 = vmul.f32 %v611, %v678
        %v727 = vmul.f32 %v611, %v682
        %v728 = vmul.f32 %v611, %v686
        %v729 = vmul.f32 %v611, %v690
        %v730 = vmul.f32 %v611, %v694
        %v731 = vmul.f32 %v611, %v698
        %v732 = vmul.f32 %v611, %v702
        %v733 = vadd.f32 %v571, %v703
        %v734 = vadd.f32 %v572, %v704
        %v735 = vadd.f32 %v573, %v705
        %v736 = vadd.f32 %v574, %v706
        %v737 = vadd.f32 %v575, %v707
        %v738 = vadd.f32 %v576, %v708
        %v739 = vadd.f32 %v577, %v709
        %v740 = vadd.f32 %v578, %v710
        %v741 = vadd.f32 %v579, %v711
        %v742 = vadd.f32 %v580, %v712
        %v743 = vadd.f32 %v581, %v713
        %v744 = vadd.f32 %v582, %v714
        %v745 = vadd.f32 %v583, %v715
        %v746 = vadd.f32 %v584, %v716
        %v747 = vadd.f32 %v585, %v717
        %v748 = vadd.f32 %v586, %v718
        %v749 = vadd.f32 %v587, %v719
        %v750 = vadd.f32 %v588, %v720
        %v751 = vadd.f32 %v589, %v721
        %v752 = vadd.f32 %v590, %v722
        %v753 = vadd.f32 %v591, %v723
        %v754 = vadd.f32 %v592, %v724
        %v755 = vadd.f32 %v593, %v725
        %v756 = vadd.f32 %v594, %v726
        %v757 = vadd.f32 %v595, %v727
        %v758 = vadd.f32 %v596, %v728
        %v759 = vadd.f32 %v597, %v729
        %v760 = vadd.f32 %v598, %v730
        %v761 = vadd.f32 %v599, %v731
        %v762 = vadd.f32 %v600, %v732
        %763 = vset.pattern.permute.xlu0 3
        %764 = vperm.xlu0 %763, %v248
        %v765 = vpop.permute.xlu0 %764
        %767 = vset.pattern.permute.xlu0 3
        %768 = vperm.xlu0 %767, %v249
        %v769 = vpop.permute.xlu0 %768
        %771 = vset.pattern.permute.xlu0 3
        %772 = vperm.xlu0 %771, %v250
        %v773 = vpop.permute.xlu0 %772
        %v775 = vlaneseq
        %v776 = vshrl.u32 %v775, 7
        %v777 = vsub.s32 3, %v776
        %v778 = vrot.slane %v243, %v777
        %v779 = vlaneseq
        %v780 = vshrl.u32 %v779, 7
        %v781 = vsub.s32 7, %v780
        %v782 = vrot.slane %v243, %v781
        %v783 = vlaneseq
        %v784 = vshrl.u32 %v783, 7
        %v785 = vsub.s32 3, %v784
        %v786 = vrot.slane %v244, %v785
        %v787 = vlaneseq
        %v788 = vshrl.u32 %v787, 7
        %v789 = vsub.s32 7, %v788
        %v790 = vrot.slane %v244, %v789
        %v791 = vlaneseq
        %v792 = vshrl.u32 %v791, 7
        %v793 = vsub.s32 3, %v792
        %v794 = vrot.slane %v245, %v793
        %v795 = vlaneseq
        %v796 = vshrl.u32 %v795, 7
        %v797 = vsub.s32 7, %v796
        %v798 = vrot.slane %v245, %v797
        %v799 = vlaneseq
        %v800 = vshrl.u32 %v799, 7
        %v801 = vsub.s32 3, %v800
        %v802 = vrot.slane %v246, %v801
        %v803 = vlaneseq
        %v804 = vshrl.u32 %v803, 7
        %v805 = vsub.s32 7, %v804
        %v806 = vrot.slane %v246, %v805
        %v807 = vlaneseq
        %v808 = vshrl.u32 %v807, 7
        %v809 = vsub.s32 3, %v808
        %v810 = vrot.slane %v247, %v809
        %v811 = vlaneseq
        %v812 = vshrl.u32 %v811, 7
        %v813 = vsub.s32 7, %v812
        %v814 = vrot.slane %v247, %v813
        %v825 = vlaneseq
        %v826 = vshrl.u32 %v825, 7
        %v827 = vsub.s32 3, %v826
        %v828 = vrot.slane %v778, %v827
        %v829 = vlaneseq
        %v830 = vshrl.u32 %v829, 7
        %v831 = vsub.s32 3, %v830
        %v832 = vrot.slane %v782, %v831
        %v833 = vlaneseq
        %v834 = vshrl.u32 %v833, 7
        %v835 = vsub.s32 3, %v834
        %v836 = vrot.slane %v786, %v835
        %v837 = vlaneseq
        %v838 = vshrl.u32 %v837, 7
        %v839 = vsub.s32 3, %v838
        %v840 = vrot.slane %v790, %v839
        %v841 = vlaneseq
        %v842 = vshrl.u32 %v841, 7
        %v843 = vsub.s32 3, %v842
        %v844 = vrot.slane %v794, %v843
        %v845 = vlaneseq
        %v846 = vshrl.u32 %v845, 7
        %v847 = vsub.s32 3, %v846
        %v848 = vrot.slane %v798, %v847
        %v849 = vlaneseq
        %v850 = vshrl.u32 %v849, 7
        %v851 = vsub.s32 3, %v850
        %v852 = vrot.slane %v802, %v851
        %v853 = vlaneseq
        %v854 = vshrl.u32 %v853, 7
        %v855 = vsub.s32 3, %v854
        %v856 = vrot.slane %v806, %v855
        %v857 = vlaneseq
        %v858 = vshrl.u32 %v857, 7
        %v859 = vsub.s32 3, %v858
        %v860 = vrot.slane %v810, %v859
        %v861 = vlaneseq
        %v862 = vshrl.u32 %v861, 7
        %v863 = vsub.s32 3, %v862
        %v864 = vrot.slane %v814, %v863
        %v865 = vmul.f32 %v765, %v828
        %v866 = vmul.f32 %v765, %v832
        %v867 = vmul.f32 %v765, %v836
        %v868 = vmul.f32 %v765, %v840
        %v869 = vmul.f32 %v765, %v844
        %v870 = vmul.f32 %v765, %v848
        %v871 = vmul.f32 %v765, %v852
        %v872 = vmul.f32 %v765, %v856
        %v873 = vmul.f32 %v765, %v860
        %v874 = vmul.f32 %v765, %v864
        %v875 = vmul.f32 %v769, %v828
        %v876 = vmul.f32 %v769, %v832
        %v877 = vmul.f32 %v769, %v836
        %v878 = vmul.f32 %v769, %v840
        %v879 = vmul.f32 %v769, %v844
        %v880 = vmul.f32 %v769, %v848
        %v881 = vmul.f32 %v769, %v852
        %v882 = vmul.f32 %v769, %v856
        %v883 = vmul.f32 %v769, %v860
        %v884 = vmul.f32 %v769, %v864
        %v885 = vmul.f32 %v773, %v828
        %v886 = vmul.f32 %v773, %v832
        %v887 = vmul.f32 %v773, %v836
        %v888 = vmul.f32 %v773, %v840
        %v889 = vmul.f32 %v773, %v844
        %v890 = vmul.f32 %v773, %v848
        %v891 = vmul.f32 %v773, %v852
        %v892 = vmul.f32 %v773, %v856
        %v893 = vmul.f32 %v773, %v860
        %v894 = vmul.f32 %v773, %v864
        %v895 = vadd.f32 %v733, %v865
        %v896 = vadd.f32 %v734, %v866
        %v897 = vadd.f32 %v735, %v867
        %v898 = vadd.f32 %v736, %v868
        %v899 = vadd.f32 %v737, %v869
        %v900 = vadd.f32 %v738, %v870
        %v901 = vadd.f32 %v739, %v871
        %v902 = vadd.f32 %v740, %v872
        %v903 = vadd.f32 %v741, %v873
        %v904 = vadd.f32 %v742, %v874
        %v905 = vadd.f32 %v743, %v875
        %v906 = vadd.f32 %v744, %v876
        %v907 = vadd.f32 %v745, %v877
        %v908 = vadd.f32 %v746, %v878
        %v909 = vadd.f32 %v747, %v879
        %v910 = vadd.f32 %v748, %v880
        %v911 = vadd.f32 %v749, %v881
        %v912 = vadd.f32 %v750, %v882
        %v913 = vadd.f32 %v751, %v883
        %v914 = vadd.f32 %v752, %v884
        %v915 = vadd.f32 %v753, %v885
        %v916 = vadd.f32 %v754, %v886
        %v917 = vadd.f32 %v755, %v887
        %v918 = vadd.f32 %v756, %v888
        %v919 = vadd.f32 %v757, %v889
        %v920 = vadd.f32 %v758, %v890
        %v921 = vadd.f32 %v759, %v891
        %v922 = vadd.f32 %v760, %v892
        %v923 = vadd.f32 %v761, %v893
        %v924 = vadd.f32 %v762, %v894
        %v925 = vmax.f32 %v895, 0.0
        %v926 = vmax.f32 %v896, 0.0
        %v927 = vmax.f32 %v897, 0.0
        %v928 = vmax.f32 %v898, 0.0
        %v929 = vmax.f32 %v899, 0.0
        %v930 = vmax.f32 %v900, 0.0
        %v931 = vmax.f32 %v901, 0.0
        %v932 = vmax.f32 %v902, 0.0
        %v933 = vmax.f32 %v903, 0.0
        %v934 = vmax.f32 %v904, 0.0
        %v935 = vmax.f32 %v905, 0.0
        %v936 = vmax.f32 %v906, 0.0
        %v937 = vmax.f32 %v907, 0.0
        %v938 = vmax.f32 %v908, 0.0
        %v939 = vmax.f32 %v909, 0.0
        %v940 = vmax.f32 %v910, 0.0
        %v941 = vmax.f32 %v911, 0.0
        %v942 = vmax.f32 %v912, 0.0
        %v943 = vmax.f32 %v913, 0.0
        %v944 = vmax.f32 %v914, 0.0
        %v945 = vmax.f32 %v915, 0.0
        %v946 = vmax.f32 %v916, 0.0
        %v947 = vmax.f32 %v917, 0.0
        %v948 = vmax.f32 %v918, 0.0
        %v949 = vmax.f32 %v919, 0.0
        %v950 = vmax.f32 %v920, 0.0
        %v951 = vmax.f32 %v921, 0.0
        %v952 = vmax.f32 %v922, 0.0
        %v953 = vmax.f32 %v923, 0.0
        %v954 = vmax.f32 %v924, 0.0
        %v955 = vld [vmem:[%s3] sm:$0x7]
        %v956 = vld [vmem:[%s4] sm:$0x7]
        %958 = vset.pattern.permute.xlu0 0
        %959 = vperm.xlu0 %958, %v956
        %v960 = vpop.permute.xlu0 %959
        %vm962 = vcmask 162816
        %v964 = vsel %vm962, %v955, 0
        %vm966 = vcmask 1043456
        %v968 = vsel %vm966, %v945, 0
        %v971 = vsel %vm966, %v946, 0
        %v974 = vsel %vm966, %v947, 0
        %v977 = vsel %vm966, %v948, 0
        %v980 = vsel %vm966, %v949, 0
        %v983 = vsel %vm966, %v950, 0
        %v986 = vsel %vm966, %v951, 0
        %v989 = vsel %vm966, %v952, 0
        %v992 = vsel %vm966, %v953, 0
        %v995 = vsel %vm966, %v954, 0
        %997 = vmatprep.subr.mxu0 %v926
        %998 = vmatpush1.msra.mxu0 %v925
        %999 = vmatprep.subr.mxu0 %v936
        %1000 = vmatpush1.msra.mxu0 %v935
        %1001 = vmatprep.subr.mxu0 %v971
        %1002 = vmatpush1.msra.mxu0 %v968
        %1003 = vmatprep.subr.mxu0 0.0
        %1004 = vmatpush1.msra.mxu0 0.0
        %1005 = vmatprep.subr.mxu0 0.0
        %1006 = vmatpush1.msra.mxu0 0.0
        %1007 = vmatprep.subr.mxu0 0.0
        %1008 = vmatpush1.msra.mxu0 0.0
        %1009 = vmatprep.subr.mxu0 0.0
        %1010 = vmatpush1.msra.mxu0 0.0
        %1011 = vmatprep.subr.mxu0 0.0
        %1012 = vmatpush1.msra.mxu0 0.0
        %1013 = vmatprep.subr.mxu0 0.0
        %1014 = vmatpush1.msra.mxu0 0.0
        %1015 = vmatprep.subr.mxu0 0.0
        %1016 = vmatpush1.msra.mxu0 0.0
        %1017 = vmatprep.subr.mxu0 0.0
        %1018 = vmatpush1.msra.mxu0 0.0
        %1019 = vmatprep.subr.mxu0 0.0
        %1020 = vmatpush1.msra.mxu0 0.0
        %1021 = vmatprep.subr.mxu0 0.0
        %1022 = vmatpush1.msra.mxu0 0.0
        %1023 = vmatprep.subr.mxu0 0.0
        %1024 = vmatpush1.msra.mxu0 0.0
        %1025 = vmatprep.subr.mxu0 0.0
        %1026 = vmatpush1.msra.mxu0 0.0
        %1027 = vmatprep.subr.mxu0 0.0
        %1028 = vmatpush1.msra.mxu0 0.0
        %1029 = vmatprep.subr.mxu0 0.0
        %1030 = vmatpush1.msra.mxu0 0.0
        %1031 = vmatprep.subr.mxu0 0.0
        %1032 = vmatpush1.msra.mxu0 0.0
        %1033 = vmatprep.subr.mxu0 0.0
        %1034 = vmatpush1.msra.mxu0 0.0
        %1035 = vmatprep.subr.mxu0 0.0
        %1036 = vmatpush1.msra.mxu0 0.0
        %1037 = vmatprep.subr.mxu0 0.0
        %1038 = vmatpush1.msra.mxu0 0.0
        %1039 = vmatprep.subr.mxu0 0.0
        %1040 = vmatpush1.msra.mxu0 0.0
        %1041 = vmatprep.subr.mxu0 0.0
        %1042 = vmatpush1.msra.mxu0 0.0
        %1043 = vmatprep.subr.mxu0 0.0
        %1044 = vmatpush1.msra.mxu0 0.0
        %1045 = vmatprep.subr.mxu0 0.0
        %1046 = vmatpush1.msra.mxu0 0.0
        %1047 = vmatprep.subr.mxu0 0.0
        %1048 = vmatpush1.msra.mxu0 0.0
        %1049 = vmatprep.subr.mxu0 0.0
        %1050 = vmatpush1.msra.mxu0 0.0
        %1051 = vmatprep.subr.mxu0 0.0
        %1052 = vmatpush1.msra.mxu0 0.0
        %1053 = vmatprep.subr.mxu0 0.0
        %1054 = vmatpush1.msra.mxu0 0.0
        %1055 = vmatprep.subr.mxu0 0.0
        %1056 = vmatpush1.msra.mxu0 0.0
        %1057 = vmatprep.subr.mxu0 0.0
        %1058 = vmatpush1.msra.mxu0 0.0
        %1059 = vmatprep.subr.mxu0 0.0
        %1060 = vmatpush1.msra.mxu0 0.0
        %1061 = vmatprep.mubr.f32.mxu0 0.0
        %1062 = vmatmul.mubr.f32.gmra.mrb[0].mxu0 %v964
        %v1063 = vpop.f32.mrb[0].mxu0
        %v1064 = vadd.f32 %v960, %v1063
        %v1065 = vpop.f32.mrb[0].mxu0
        %v1066 = vadd.f32 %v960, %v1065
        %1067 = vdwg.mxu0
        %1068 = vmatprep.subr.mxu0 %v928
        %1069 = vmatpush1.msra.mxu0 %v927
        %1070 = vmatprep.subr.mxu0 %v938
        %1071 = vmatpush1.msra.mxu0 %v937
        %1072 = vmatprep.subr.mxu0 %v977
        %1073 = vmatpush1.msra.mxu0 %v974
        %1074 = vmatprep.subr.mxu0 0.0
        %1075 = vmatpush1.msra.mxu0 0.0
        %1076 = vmatprep.subr.mxu0 0.0
        %1077 = vmatpush1.msra.mxu0 0.0
        %1078 = vmatprep.subr.mxu0 0.0
        %1079 = vmatpush1.msra.mxu0 0.0
        %1080 = vmatprep.subr.mxu0 0.0
        %1081 = vmatpush1.msra.mxu0 0.0
        %1082 = vmatprep.subr.mxu0 0.0
        %1083 = vmatpush1.msra.mxu0 0.0
        %1084 = vmatprep.subr.mxu0 0.0
        %1085 = vmatpush1.msra.mxu0 0.0
        %1086 = vmatprep.subr.mxu0 0.0
        %1087 = vmatpush1.msra.mxu0 0.0
        %1088 = vmatprep.subr.mxu0 0.0
        %1089 = vmatpush1.msra.mxu0 0.0
        %1090 = vmatprep.subr.mxu0 0.0
        %1091 = vmatpush1.msra.mxu0 0.0
        %1092 = vmatprep.subr.mxu0 0.0
        %1093 = vmatpush1.msra.mxu0 0.0
        %1094 = vmatprep.subr.mxu0 0.0
        %1095 = vmatpush1.msra.mxu0 0.0
        %1096 = vmatprep.subr.mxu0 0.0
        %1097 = vmatpush1.msra.mxu0 0.0
        %1098 = vmatprep.subr.mxu0 0.0
        %1099 = vmatpush1.msra.mxu0 0.0
        %1100 = vmatprep.subr.mxu0 0.0
        %1101 = vmatpush1.msra.mxu0 0.0
        %1102 = vmatprep.subr.mxu0 0.0
        %1103 = vmatpush1.msra.mxu0 0.0
        %1104 = vmatprep.subr.mxu0 0.0
        %1105 = vmatpush1.msra.mxu0 0.0
        %1106 = vmatprep.subr.mxu0 0.0
        %1107 = vmatpush1.msra.mxu0 0.0
        %1108 = vmatprep.subr.mxu0 0.0
        %1109 = vmatpush1.msra.mxu0 0.0
        %1110 = vmatprep.subr.mxu0 0.0
        %1111 = vmatpush1.msra.mxu0 0.0
        %1112 = vmatprep.subr.mxu0 0.0
        %1113 = vmatpush1.msra.mxu0 0.0
        %1114 = vmatprep.subr.mxu0 0.0
        %1115 = vmatpush1.msra.mxu0 0.0
        %1116 = vmatprep.subr.mxu0 0.0
        %1117 = vmatpush1.msra.mxu0 0.0
        %1118 = vmatprep.subr.mxu0 0.0
        %1119 = vmatpush1.msra.mxu0 0.0
        %1120 = vmatprep.subr.mxu0 0.0
        %1121 = vmatpush1.msra.mxu0 0.0
        %1122 = vmatprep.subr.mxu0 0.0
        %1123 = vmatpush1.msra.mxu0 0.0
        %1124 = vmatprep.subr.mxu0 0.0
        %1125 = vmatpush1.msra.mxu0 0.0
        %1126 = vmatprep.subr.mxu0 0.0
        %1127 = vmatpush1.msra.mxu0 0.0
        %1128 = vmatprep.subr.mxu0 0.0
        %1129 = vmatpush1.msra.mxu0 0.0
        %1130 = vmatprep.subr.mxu0 0.0
        %1131 = vmatpush1.msra.mxu0 0.0
        %1132 = vmatprep.mubr.f32.mxu0 0.0
        %1133 = vmatmul.mubr.f32.gmra.mrb[0].mxu0 %v964
        %v1134 = vpop.f32.mrb[0].mxu0
        %v1135 = vadd.f32 %v960, %v1134
        %v1136 = vpop.f32.mrb[0].mxu0
        %v1137 = vadd.f32 %v960, %v1136
        %1138 = vdwg.mxu0
        %1139 = vmatprep.subr.mxu0 %v930
        %1140 = vmatpush1.msra.mxu0 %v929
        %1141 = vmatprep.subr.mxu0 %v940
        %1142 = vmatpush1.msra.mxu0 %v939
        %1143 = vmatprep.subr.mxu0 %v983
        %1144 = vmatpush1.msra.mxu0 %v980
        %1145 = vmatprep.subr.mxu0 0.0
        %1146 = vmatpush1.msra.mxu0 0.0
        %1147 = vmatprep.subr.mxu0 0.0
        %1148 = vmatpush1.msra.mxu0 0.0
        %1149 = vmatprep.subr.mxu0 0.0
        %1150 = vmatpush1.msra.mxu0 0.0
        %1151 = vmatprep.subr.mxu0 0.0
        %1152 = vmatpush1.msra.mxu0 0.0
        %1153 = vmatprep.subr.mxu0 0.0
        %1154 = vmatpush1.msra.mxu0 0.0
        %1155 = vmatprep.subr.mxu0 0.0
        %1156 = vmatpush1.msra.mxu0 0.0
        %1157 = vmatprep.subr.mxu0 0.0
        %1158 = vmatpush1.msra.mxu0 0.0
        %1159 = vmatprep.subr.mxu0 0.0
        %1160 = vmatpush1.msra.mxu0 0.0
        %1161 = vmatprep.subr.mxu0 0.0
        %1162 = vmatpush1.msra.mxu0 0.0
        %1163 = vmatprep.subr.mxu0 0.0
        %1164 = vmatpush1.msra.mxu0 0.0
        %1165 = vmatprep.subr.mxu0 0.0
        %1166 = vmatpush1.msra.mxu0 0.0
        %1167 = vmatprep.subr.mxu0 0.0
        %1168 = vmatpush1.msra.mxu0 0.0
        %1169 = vmatprep.subr.mxu0 0.0
        %1170 = vmatpush1.msra.mxu0 0.0
        %1171 = vmatprep.subr.mxu0 0.0
        %1172 = vmatpush1.msra.mxu0 0.0
        %1173 = vmatprep.subr.mxu0 0.0
        %1174 = vmatpush1.msra.mxu0 0.0
        %1175 = vmatprep.subr.mxu0 0.0
        %1176 = vmatpush1.msra.mxu0 0.0
        %1177 = vmatprep.subr.mxu0 0.0
        %1178 = vmatpush1.msra.mxu0 0.0
        %1179 = vmatprep.subr.mxu0 0.0
        %1180 = vmatpush1.msra.mxu0 0.0
        %1181 = vmatprep.subr.mxu0 0.0
        %1182 = vmatpush1.msra.mxu0 0.0
        %1183 = vmatprep.subr.mxu0 0.0
        %1184 = vmatpush1.msra.mxu0 0.0
        %1185 = vmatprep.subr.mxu0 0.0
        %1186 = vmatpush1.msra.mxu0 0.0
        %1187 = vmatprep.subr.mxu0 0.0
        %1188 = vmatpush1.msra.mxu0 0.0
        %1189 = vmatprep.subr.mxu0 0.0
        %1190 = vmatpush1.msra.mxu0 0.0
        %1191 = vmatprep.subr.mxu0 0.0
        %1192 = vmatpush1.msra.mxu0 0.0
        %1193 = vmatprep.subr.mxu0 0.0
        %1194 = vmatpush1.msra.mxu0 0.0
        %1195 = vmatprep.subr.mxu0 0.0
        %1196 = vmatpush1.msra.mxu0 0.0
        %1197 = vmatprep.subr.mxu0 0.0
        %1198 = vmatpush1.msra.mxu0 0.0
        %1199 = vmatprep.subr.mxu0 0.0
        %1200 = vmatpush1.msra.mxu0 0.0
        %1201 = vmatprep.subr.mxu0 0.0
        %1202 = vmatpush1.msra.mxu0 0.0
        %1203 = vmatprep.mubr.f32.mxu0 0.0
        %1204 = vmatmul.mubr.f32.gmra.mrb[0].mxu0 %v964
        %v1205 = vpop.f32.mrb[0].mxu0
        %v1206 = vadd.f32 %v960, %v1205
        %v1207 = vpop.f32.mrb[0].mxu0
        %v1208 = vadd.f32 %v960, %v1207
        %1209 = vdwg.mxu0
        %1210 = vmatprep.subr.mxu0 %v932
        %1211 = vmatpush1.msra.mxu0 %v931
        %1212 = vmatprep.subr.mxu0 %v942
        %1213 = vmatpush1.msra.mxu0 %v941
        %1214 = vmatprep.subr.mxu0 %v989
        %1215 = vmatpush1.msra.mxu0 %v986
        %1216 = vmatprep.subr.mxu0 0.0
        %1217 = vmatpush1.msra.mxu0 0.0
        %1218 = vmatprep.subr.mxu0 0.0
        %1219 = vmatpush1.msra.mxu0 0.0
        %1220 = vmatprep.subr.mxu0 0.0
        %1221 = vmatpush1.msra.mxu0 0.0
        %1222 = vmatprep.subr.mxu0 0.0
        %1223 = vmatpush1.msra.mxu0 0.0
        %1224 = vmatprep.subr.mxu0 0.0
        %1225 = vmatpush1.msra.mxu0 0.0
        %1226 = vmatprep.subr.mxu0 0.0
        %1227 = vmatpush1.msra.mxu0 0.0
        %1228 = vmatprep.subr.mxu0 0.0
        %1229 = vmatpush1.msra.mxu0 0.0
        %1230 = vmatprep.subr.mxu0 0.0
        %1231 = vmatpush1.msra.mxu0 0.0
        %1232 = vmatprep.subr.mxu0 0.0
        %1233 = vmatpush1.msra.mxu0 0.0
        %1234 = vmatprep.subr.mxu0 0.0
        %1235 = vmatpush1.msra.mxu0 0.0
        %1236 = vmatprep.subr.mxu0 0.0
        %1237 = vmatpush1.msra.mxu0 0.0
        %1238 = vmatprep.subr.mxu0 0.0
        %1239 = vmatpush1.msra.mxu0 0.0
        %1240 = vmatprep.subr.mxu0 0.0
        %1241 = vmatpush1.msra.mxu0 0.0
        %1242 = vmatprep.subr.mxu0 0.0
        %1243 = vmatpush1.msra.mxu0 0.0
        %1244 = vmatprep.subr.mxu0 0.0
        %1245 = vmatpush1.msra.mxu0 0.0
        %1246 = vmatprep.subr.mxu0 0.0
        %1247 = vmatpush1.msra.mxu0 0.0
        %1248 = vmatprep.subr.mxu0 0.0
        %1249 = vmatpush1.msra.mxu0 0.0
        %1250 = vmatprep.subr.mxu0 0.0
        %1251 = vmatpush1.msra.mxu0 0.0
        %1252 = vmatprep.subr.mxu0 0.0
        %1253 = vmatpush1.msra.mxu0 0.0
        %1254 = vmatprep.subr.mxu0 0.0
        %1255 = vmatpush1.msra.mxu0 0.0
        %1256 = vmatprep.subr.mxu0 0.0
        %1257 = vmatpush1.msra.mxu0 0.0
        %1258 = vmatprep.subr.mxu0 0.0
        %1259 = vmatpush1.msra.mxu0 0.0
        %1260 = vmatprep.subr.mxu0 0.0
        %1261 = vmatpush1.msra.mxu0 0.0
        %1262 = vmatprep.subr.mxu0 0.0
        %1263 = vmatpush1.msra.mxu0 0.0
        %1264 = vmatprep.subr.mxu0 0.0
        %1265 = vmatpush1.msra.mxu0 0.0
        %1266 = vmatprep.subr.mxu0 0.0
        %1267 = vmatpush1.msra.mxu0 0.0
        %1268 = vmatprep.subr.mxu0 0.0
        %1269 = vmatpush1.msra.mxu0 0.0
        %1270 = vmatprep.subr.mxu0 0.0
        %1271 = vmatpush1.msra.mxu0 0.0
        %1272 = vmatprep.subr.mxu0 0.0
        %1273 = vmatpush1.msra.mxu0 0.0
        %1274 = vmatprep.mubr.f32.mxu0 0.0
        %1275 = vmatmul.mubr.f32.gmra.mrb[0].mxu0 %v964
        %v1276 = vpop.f32.mrb[0].mxu0
        %v1277 = vadd.f32 %v960, %v1276
        %v1278 = vpop.f32.mrb[0].mxu0
        %v1279 = vadd.f32 %v960, %v1278
        %1280 = vdwg.mxu0
        %1281 = vmatprep.subr.mxu0 %v934
        %1282 = vmatpush1.msra.mxu0 %v933
        %1283 = vmatprep.subr.mxu0 %v944
        %1284 = vmatpush1.msra.mxu0 %v943
        %1285 = vmatprep.subr.mxu0 %v995
        %1286 = vmatpush1.msra.mxu0 %v992
        %1287 = vmatprep.subr.mxu0 0.0
        %1288 = vmatpush1.msra.mxu0 0.0
        %1289 = vmatprep.subr.mxu0 0.0
        %1290 = vmatpush1.msra.mxu0 0.0
        %1291 = vmatprep.subr.mxu0 0.0
        %1292 = vmatpush1.msra.mxu0 0.0
        %1293 = vmatprep.subr.mxu0 0.0
        %1294 = vmatpush1.msra.mxu0 0.0
        %1295 = vmatprep.subr.mxu0 0.0
        %1296 = vmatpush1.msra.mxu0 0.0
        %1297 = vmatprep.subr.mxu0 0.0
        %1298 = vmatpush1.msra.mxu0 0.0
        %1299 = vmatprep.subr.mxu0 0.0
        %1300 = vmatpush1.msra.mxu0 0.0
        %1301 = vmatprep.subr.mxu0 0.0
        %1302 = vmatpush1.msra.mxu0 0.0
        %1303 = vmatprep.subr.mxu0 0.0
        %1304 = vmatpush1.msra.mxu0 0.0
        %1305 = vmatprep.subr.mxu0 0.0
        %1306 = vmatpush1.msra.mxu0 0.0
        %1307 = vmatprep.subr.mxu0 0.0
        %1308 = vmatpush1.msra.mxu0 0.0
        %1309 = vmatprep.subr.mxu0 0.0
        %1310 = vmatpush1.msra.mxu0 0.0
        %1311 = vmatprep.subr.mxu0 0.0
        %1312 = vmatpush1.msra.mxu0 0.0
        %1313 = vmatprep.subr.mxu0 0.0
        %1314 = vmatpush1.msra.mxu0 0.0
        %1315 = vmatprep.subr.mxu0 0.0
        %1316 = vmatpush1.msra.mxu0 0.0
        %1317 = vmatprep.subr.mxu0 0.0
        %1318 = vmatpush1.msra.mxu0 0.0
        %1319 = vmatprep.subr.mxu0 0.0
        %1320 = vmatpush1.msra.mxu0 0.0
        %1321 = vmatprep.subr.mxu0 0.0
        %1322 = vmatpush1.msra.mxu0 0.0
        %1323 = vmatprep.subr.mxu0 0.0
        %1324 = vmatpush1.msra.mxu0 0.0
        %1325 = vmatprep.subr.mxu0 0.0
        %1326 = vmatpush1.msra.mxu0 0.0
        %1327 = vmatprep.subr.mxu0 0.0
        %1328 = vmatpush1.msra.mxu0 0.0
        %1329 = vmatprep.subr.mxu0 0.0
        %1330 = vmatpush1.msra.mxu0 0.0
        %1331 = vmatprep.subr.mxu0 0.0
        %1332 = vmatpush1.msra.mxu0 0.0
        %1333 = vmatprep.subr.mxu0 0.0
        %1334 = vmatpush1.msra.mxu0 0.0
        %1335 = vmatprep.subr.mxu0 0.0
        %1336 = vmatpush1.msra.mxu0 0.0
        %1337 = vmatprep.subr.mxu0 0.0
        %1338 = vmatpush1.msra.mxu0 0.0
        %1339 = vmatprep.subr.mxu0 0.0
        %1340 = vmatpush1.msra.mxu0 0.0
        %1341 = vmatprep.subr.mxu0 0.0
        %1342 = vmatpush1.msra.mxu0 0.0
        %1343 = vmatprep.subr.mxu0 0.0
        %1344 = vmatpush1.msra.mxu0 0.0
        %1345 = vmatprep.mubr.f32.mxu0 0.0
        %1346 = vmatmul.mubr.f32.gmra.mrb[0].mxu0 %v964
        %v1347 = vpop.f32.mrb[0].mxu0
        %v1348 = vadd.f32 %v960, %v1347
        %v1349 = vpop.f32.mrb[0].mxu0
        %v1350 = vadd.f32 %v960, %v1349
        %1351 = vdwg.mxu0
        %v1362 = vcombine.low %v1064, %v1066
        %v1363 = vcombine.low %v1135, %v1137
        %v1364 = vcombine.low %v1206, %v1208
        %v1365 = vcombine.low %v1277, %v1279
        %v1366 = vcombine.low %v1348, %v1350
        %1372 = vst [vmem:[%s240] sm:$0x77] %v1362
        %1373 = vst [vmem:[%s240 + $0x8] sm:$0x77] %v1363
        %1374 = vst [vmem:[%s240 + $0x10] sm:$0x77] %v1364
        %1375 = vst [vmem:[%s240 + $0x18] sm:$0x77] %v1365
        %1376 = vst [vmem:[%s240 + $0x20] sm:$0x77] %v1366
        %s1377 = sand.u32 %s140, 1
        %s1378 = scalar_lea.sflag [#allocation4], %s1377
        %s1379 = sand.u32 %s140, 1
        %s1380 = smul.addr %s1379, 40
        %s1381 = scalar_lea.vmem [#allocation5], %s1380
        // Predicated region
        $region45: #{ann_one_hid_feature_major.1} parent=39 // pred_check
          %p1382 = pneg %p150
        $region46: #{ann_one_hid_feature_major.1} parent=39 // pred_check_branch
          %1384 = sbr.rel (%p1382) target = $region48
        $region47: #{ann_one_hid_feature_major.1} parent=39 // pred_region
          %s1385 = smul.u32 10, %s22
          %s1387 = ssub.s32 640, 640
          %1388 = vsyncadd %s1378, %s1387
          %s1389 = smul.addr %s1385, 64
          %s1390 = scalar_lea.hbm %s5, %s1389
          %s1392 = sshll.u32 %s1381, 4
          %s1393 = int_to_ptr.vmem [resolvable:$true] %s1392
          %1395 = dma.vmem_to_hbm [thread:$0]  %s1393, 640, %s1390, %s1378
        $region48: #{ann_one_hid_feature_major.1} parent=39 // pred_fallthru
          _
      $region40: #{ann_one_hid_feature_major.1} parent=5 // pred_fallthru
        _
      %p1396 = scmp.le.s32.totalorder 2, %s17
      // Predicated region
      $region49: #{ann_one_hid_feature_major.1} parent=5 // pred_check
        %p1397 = pneg %p1396
      $region50: #{ann_one_hid_feature_major.1} parent=5 // pred_check_branch
        %1399 = sbr.rel (%p1397) target = $region52
      $region51: #{ann_one_hid_feature_major.1} parent=5 // pred_region
        %s1400 = ssub.s32 %s17, 2
        // Predicated region
        $region53: #{ann_one_hid_feature_major.1} parent=51 // pred_check
          %p1401 = pneg %p156
        $region54: #{ann_one_hid_feature_major.1} parent=51 // pred_check_branch
          %1403 = sbr.rel (%p1401) target = $region56
        $region55: #{ann_one_hid_feature_major.1} parent=51 // pred_region
          %s1404 = sand.u32 %s141, 1
          %s1405 = scalar_lea.sflag [#allocation4], %s1404
          %s1406 = sand.u32 %s141, 1
          %s1407 = smul.addr %s1406, 40
          %s1408 = scalar_lea.vmem [#allocation5], %s1407
          %1409 = dma.done %s1405, 640
        $region56: #{ann_one_hid_feature_major.1} parent=51 // pred_fallthru
          _
      $region52: #{ann_one_hid_feature_major.1} parent=5 // pred_fallthru
        _
    $region6: #{ann_one_hid_feature_major.1} parent=1 // loop_footer
      %s21 = sadd.s32 1, %s17
    $region7: #{ann_one_hid_feature_major.1} parent=1 // loop_footer_branch
      %16 = sbr.rel target = $region3
    $region8: #{ann_one_hid_feature_major.1} parent=1 // loop_exit
      _
    %1410 = vsyncpa [#allocation3], 1
    %s1411 = scalar_lea.sflag [#allocation3], 1
    %1412 = vsyncpa %s1411, 1
    %1413 = vsyncpa [#allocation4], 1
    %s1414 = scalar_lea.sflag [#allocation4], 1
    %1415 = vsyncpa %s1414, 1

</llo_original>
